<compile_context>
chip_gen: v5e
topology: v5e:2x2
jax: 0.10.0
libtpu: 0.0.40
codegen_flags: <defaults>
</compile_context>

<pallas_src>
import math

import jax
import jax.numpy as jnp
from jax.experimental import pallas as pl
from jax.experimental.pallas import tpu as pltpu


# ---------------------------------------------------------------------------
# Fused forward kernel (block_b batch elements per grid step):
#   att    = softmax((X Wq')(X Wk)^T) (X Wv')     # Wq' = Wq/sqrt(D), Wv' = 2*Wv
#   h      = relu(A @ (att @ W1) + b1)            # gcn1  (att already == 2*state0)
#   logits = A @ (h @ W2) + b2                    # gcn2
# ---------------------------------------------------------------------------
def _fused_forward_kernel(x_ref, adj_ref, wq_ref, wk_ref, wv_ref,
                          w1_ref, b1_ref, w2_ref, b2_ref, o_ref):
    Bb, N, D = x_ref.shape
    H = w1_ref.shape[1]

    # bf16 MXU operands, f32 accumulation (f32 matmuls are emulated ~3x slower).
    x = x_ref[...].astype(jnp.bfloat16)                      # (Bb, N, D)
    adj = adj_ref[...].astype(jnp.bfloat16)                  # (Bb, N, N)
    x_flat = x.reshape(Bb * N, D)                            # weights are batch-shared

    # --- self-attention ----------------------------------------------------
    # Three lane-0-aligned projections (no packed-QKV lane-offset slicing).
    q = jnp.dot(x_flat, wq_ref[...], preferred_element_type=jnp.float32)
    k = jnp.dot(x_flat, wk_ref[...], preferred_element_type=jnp.float32)
    v = jnp.dot(x_flat, wv_ref[...], preferred_element_type=jnp.float32)
    q = q.reshape(Bb, N, D).astype(jnp.bfloat16)
    k = k.reshape(Bb, N, D).astype(jnp.bfloat16)
    v = v.reshape(Bb, N, D).astype(jnp.bfloat16)

    # Contract last dims directly -> MXU transposed-operand path, no explicit .T.
    s = jnp.einsum('bqd,bkd->bqk', q, k, preferred_element_type=jnp.float32)
    s = s - jnp.max(s, axis=-1, keepdims=True)
    p = jnp.exp(s)
    # Division rides the otherwise-idle EUP slot.
    attn = p * pl.reciprocal(jnp.sum(p, axis=-1, keepdims=True), approx=True)
    # Wv is pre-doubled host-side, so `feat` already equals state0 + state1.
    feat = jnp.einsum('bqk,bkd->bqd', attn.astype(jnp.bfloat16), v,
                      preferred_element_type=jnp.float32)    # (Bb, N, D)

    # --- gcn1 + ReLU ---------------------------------------------------------
    support1 = jnp.dot(feat.astype(jnp.bfloat16).reshape(Bb * N, D), w1_ref[...],
                       preferred_element_type=jnp.float32)
    support1 = support1.reshape(Bb, N, H).astype(jnp.bfloat16)
    h = jnp.einsum('bij,bjh->bih', adj, support1,
                   preferred_element_type=jnp.float32) + b1_ref[...]
    h = jnp.maximum(h, 0.0)

    # --- gcn2 ----------------------------------------------------------------
    support2 = jnp.dot(h.astype(jnp.bfloat16).reshape(Bb * N, H), w2_ref[...],
                       preferred_element_type=jnp.float32)
    support2 = support2.reshape(Bb, N, D).astype(jnp.bfloat16)
    logits = jnp.einsum('bij,bjd->bid', adj, support2,
                        preferred_element_type=jnp.float32) + b2_ref[...]

    # TODO(synk): with D=32 (<128 lanes) the final store is a masked vst; if D
    # is ever scaled to >=128, present a lane-dense (Bb, N*D) output slab.
    o_ref[...] = logits.astype(o_ref.dtype)


def _pick_block_b(B):
    """Batch elements packed per grid step.

    Packing amortizes the ~0.35us per-grid-step overhead and feeds the MXU
    block_b*N rows per matmul, but we keep >= 2 grid steps when B > 1 so both
    v7x TensorCores get work under dimension_semantics=("parallel",).  On
    v5e/v6e (single TC) a larger block_b is strictly better — pass block_b=B.
    """
    for bb in (32, 16, 8, 4, 2, 1):
        if bb <= B and B % bb == 0 and (B // bb) >= min(2, B):
            return bb
    return 1


def gcn_net_sa_forward(feature, adjacency, wq, wk, wv, w1, b1, w2, b2,
                       *, block_b=None):
    """Fused forward.  `wq` must have 1/sqrt(D) folded in, `wv` the factor 2."""
    B, N, D = feature.shape
    H = w1.shape[1]
    if block_b is None:
        block_b = _pick_block_b(B)
    assert B % block_b == 0, (B, block_b)
    grid_b = B // block_b

    # Advisory cost so XLA schedules sensibly around the custom call.
    flops = (2 * B * N * D * D * 3        # Q/K/V projections
             + 2 * B * N * N * D * 2      # QK^T and attn@V
             + 2 * B * N * D * H          # feat @ W1
             + 2 * B * N * N * H          # A @ support1
             + 2 * B * N * H * D          # h @ W2
             + 2 * B * N * N * D)         # A @ support2
    bytes_accessed = (4 * B * N * D + 4 * B * N * N       # f32 feature / adjacency
                      + 2 * (3 * D * D + D * H + H * D)   # bf16 weights (resident)
                      + 4 * (H + D)                       # f32 biases
                      + 4 * B * N * D)                    # f32 output
    cost = pl.CostEstimate(flops=flops,
                           transcendentals=B * N * (N + 1),
                           bytes_accessed=bytes_accessed)

    return pl.pallas_call(
        _fused_forward_kernel,
        out_shape=jax.ShapeDtypeStruct((B, N, D), jnp.float32),
        grid_spec=pltpu.PrefetchScalarGridSpec(
            num_scalar_prefetch=0,
            grid=(grid_b,),
            in_specs=[
                pl.BlockSpec((block_b, N, D), lambda b: (b, 0, 0)),   # feature
                pl.BlockSpec((block_b, N, N), lambda b: (b, 0, 0)),   # adjacency
                pl.BlockSpec((D, D), lambda b: (0, 0)),               # Wq (pre-scaled)
                pl.BlockSpec((D, D), lambda b: (0, 0)),               # Wk
                pl.BlockSpec((D, D), lambda b: (0, 0)),               # Wv (pre-doubled)
                pl.BlockSpec((D, H), lambda b: (0, 0)),               # W1
                pl.BlockSpec((1, H), lambda b: (0, 0)),               # b1
                pl.BlockSpec((H, D), lambda b: (0, 0)),               # W2
                pl.BlockSpec((1, D), lambda b: (0, 0)),               # b2
            ],
            out_specs=pl.BlockSpec((block_b, N, D), lambda b: (b, 0, 0)),
        ),
        compiler_params=pltpu.CompilerParams(
            dimension_semantics=("parallel",)),
        cost_estimate=cost,
    )(feature, adjacency, wq, wk, wv, w1,
      b1.reshape(1, H), w2, b2.reshape(1, D))


# ---------------------------------------------------------------------------
# Parameter init (deterministic, mirrors the module's nn.init behaviour)
# ---------------------------------------------------------------------------
def kaiming_uniform(key, shape):
    # PyTorch init.kaiming_uniform_(a=0) on a raw (input_dim, output_dim)
    # tensor uses fan_in = tensor.size(1): bound = sqrt(2) * sqrt(3 / size(1)).
    fan_in = shape[1]
    bound = math.sqrt(2.0) * math.sqrt(3.0 / fan_in)
    return jax.random.uniform(key, shape, jnp.float32, -bound, bound)


class GcnNetSAPallas:
    def __init__(self, key, input_dim=32):
        keys = jax.random.split(key, 5)
        D = input_dim
        # gcn1: D -> 16, gcn2: 16 -> D  (kaiming-uniform weight, zero bias).
        # Weights stored bf16 (MXU-native); biases stay f32 (added after the MXU).
        self.w1 = kaiming_uniform(keys[0], (D, 16)).astype(jnp.bfloat16)
        self.b1 = jnp.zeros((16,), jnp.float32)
        self.w2 = kaiming_uniform(keys[1], (16, D)).astype(jnp.bfloat16)
        self.b2 = jnp.zeros((D,), jnp.float32)
        # Self-attention projections (see TODO at top).  One-time host-side
        # folding: 1/sqrt(D) into Wq, and the state0+state1 doubling into Wv.
        sc = 0.05
        wq = sc * jax.random.normal(keys[2], (D, D), jnp.float32)
        wk = sc * jax.random.normal(keys[3], (D, D), jnp.float32)
        wv = sc * jax.random.normal(keys[4], (D, D), jnp.float32)
        self.wq = (wq / math.sqrt(D)).astype(jnp.bfloat16)
        self.wk = wk.astype(jnp.bfloat16)
        self.wv = (2.0 * wv).astype(jnp.bfloat16)

    def __call__(self, feature, left, adjacency):
        # `left` is accepted but unused, exactly as in the PyTorch forward.
        return gcn_net_sa_forward(feature, adjacency, self.wq, self.wk, self.wv,
                                  self.w1, self.b1, self.w2, self.b2)


if __name__ == "__main__":
    B, N, D = 2, 16, 32
    key = jax.random.PRNGKey(0)
    k_feat, k_adj, k_left, k_params = jax.random.split(key, 4)

    feature = jax.random.normal(k_feat, (B, N, D), jnp.float32)
    # dense, row-normalized non-negative adjacency (stand-in for the sparse adj)
    adj_raw = jnp.abs(jax.random.normal(k_adj, (B, N, N), jnp.float32))
    adjacency = adj_raw / jnp.sum(adj_raw, axis=-1, keepdims=True)
    left = jax.random.normal(k_left, (B, N), jnp.float32)      # unused by forward

    model = GcnNetSAPallas(k_params, input_dim=D)
    logits = model(feature, left, adjacency)
    jax.block_until_ready(logits)

    assert logits.shape == (B, N, D), logits.shape
    assert bool(jnp.all(jnp.isfinite(logits)))
    print("KERNEL_OK")
</pallas_src>

<mosaic_0001>
module attributes {stable_mosaic.version = 11 : i64} {
  func.func @_fused_forward_kernel(%arg0: i32, %arg1: memref<1x16x32xf32, #tpu.memory_space<vmem>>, %arg2: memref<1x16x16xf32, #tpu.memory_space<vmem>>, %arg3: memref<32x32xbf16, #tpu.memory_space<vmem>>, %arg4: memref<32x32xbf16, #tpu.memory_space<vmem>>, %arg5: memref<32x32xbf16, #tpu.memory_space<vmem>>, %arg6: memref<32x16xbf16, #tpu.memory_space<vmem>>, %arg7: memref<1x16xf32, #tpu.memory_space<vmem>>, %arg8: memref<16x32xbf16, #tpu.memory_space<vmem>>, %arg9: memref<1x32xf32, #tpu.memory_space<vmem>>, %arg10: memref<1x16x32xf32, #tpu.memory_space<vmem>>) attributes {dimension_semantics = [#tpu.dimension_semantics<parallel>], iteration_bounds = array<i64: 2>, scalar_prefetch = 0 : i64, scratch_operands = 0 : i64, tpu.core_type = #tpu.core_type<tc>, window_params = [{transform_indices = @transform_0, window_bounds = array<i64: 1, 16, 32>}, {transform_indices = @transform_1, window_bounds = array<i64: 1, 16, 16>}, {pipeline_mode = #tpu.pipeline_mode<synchronous>, transform_indices = @transform_2, window_bounds = array<i64: 32, 32>}, {pipeline_mode = #tpu.pipeline_mode<synchronous>, transform_indices = @transform_3, window_bounds = array<i64: 32, 32>}, {pipeline_mode = #tpu.pipeline_mode<synchronous>, transform_indices = @transform_4, window_bounds = array<i64: 32, 32>}, {pipeline_mode = #tpu.pipeline_mode<synchronous>, transform_indices = @transform_5, window_bounds = array<i64: 32, 16>}, {pipeline_mode = #tpu.pipeline_mode<synchronous>, transform_indices = @transform_6, window_bounds = array<i64: 1, 16>}, {pipeline_mode = #tpu.pipeline_mode<synchronous>, transform_indices = @transform_7, window_bounds = array<i64: 16, 32>}, {pipeline_mode = #tpu.pipeline_mode<synchronous>, transform_indices = @transform_8, window_bounds = array<i64: 1, 32>}, {transform_indices = @transform_9, window_bounds = array<i64: 1, 16, 32>}]} {
    %c0 = arith.constant 0 : index
    %c0_0 = arith.constant 0 : index
    %c0_1 = arith.constant 0 : index
    %0 = vector.load %arg1[%c0, %c0_0, %c0_1] : memref<1x16x32xf32, #tpu.memory_space<vmem>>, vector<1x16x32xf32>
    %1 = arith.truncf %0 : vector<1x16x32xf32> to vector<1x16x32xbf16>
    %c0_2 = arith.constant 0 : index
    %c0_3 = arith.constant 0 : index
    %c0_4 = arith.constant 0 : index
    %2 = vector.load %arg2[%c0_2, %c0_3, %c0_4] : memref<1x16x16xf32, #tpu.memory_space<vmem>>, vector<1x16x16xf32>
    %3 = arith.truncf %2 : vector<1x16x16xf32> to vector<1x16x16xbf16>
    %4 = vector.shape_cast %1 : vector<1x16x32xbf16> to vector<16x32xbf16>
    %c0_5 = arith.constant 0 : index
    %c0_6 = arith.constant 0 : index
    %5 = vector.load %arg3[%c0_5, %c0_6] : memref<32x32xbf16, #tpu.memory_space<vmem>>, vector<32x32xbf16>
    %cst = arith.constant dense<0.000000e+00> : vector<16x32xf32>
    %6 = tpu.matmul %4, %5, %cst {dimension_numbers = #tpu.dot_dimension_numbers<[1], [0], [0], [1], [0, 0, 1, 1], [], []>} : vector<16x32xbf16>, vector<32x32xbf16>, vector<16x32xf32> -> vector<16x32xf32>
    %c0_7 = arith.constant 0 : index
    %c0_8 = arith.constant 0 : index
    %7 = vector.load %arg4[%c0_7, %c0_8] : memref<32x32xbf16, #tpu.memory_space<vmem>>, vector<32x32xbf16>
    %cst_9 = arith.constant dense<0.000000e+00> : vector<16x32xf32>
    %8 = tpu.matmul %4, %7, %cst_9 {dimension_numbers = #tpu.dot_dimension_numbers<[1], [0], [0], [1], [0, 0, 1, 1], [], []>} : vector<16x32xbf16>, vector<32x32xbf16>, vector<16x32xf32> -> vector<16x32xf32>
    %c0_10 = arith.constant 0 : index
    %c0_11 = arith.constant 0 : index
    %9 = vector.load %arg5[%c0_10, %c0_11] : memref<32x32xbf16, #tpu.memory_space<vmem>>, vector<32x32xbf16>
    %cst_12 = arith.constant dense<0.000000e+00> : vector<16x32xf32>
    %10 = tpu.matmul %4, %9, %cst_12 {dimension_numbers = #tpu.dot_dimension_numbers<[1], [0], [0], [1], [0, 0, 1, 1], [], []>} : vector<16x32xbf16>, vector<32x32xbf16>, vector<16x32xf32> -> vector<16x32xf32>
    %11 = vector.shape_cast %6 : vector<16x32xf32> to vector<1x16x32xf32>
    %12 = arith.truncf %11 : vector<1x16x32xf32> to vector<1x16x32xbf16>
    %13 = vector.shape_cast %8 : vector<16x32xf32> to vector<1x16x32xf32>
    %14 = arith.truncf %13 : vector<1x16x32xf32> to vector<1x16x32xbf16>
    %15 = vector.shape_cast %10 : vector<16x32xf32> to vector<1x16x32xf32>
    %16 = arith.truncf %15 : vector<1x16x32xf32> to vector<1x16x32xbf16>
    "tpu.trace_start"() <{level = 10 : i32, message = "bqd,bkd->bqk"}> : () -> ()
    %cst_13 = arith.constant dense<0.000000e+00> : vector<1x16x16xf32>
    %17 = tpu.matmul %12, %14, %cst_13 {dimension_numbers = #tpu.dot_dimension_numbers<[2], [2], [1], [1], [0, 0, 0, 1, 1, 1], [0], [0]>} : vector<1x16x32xbf16>, vector<1x16x32xbf16>, vector<1x16x16xf32> -> vector<1x16x16xf32>
    "tpu.trace_stop"() : () -> ()
    %cst_14 = arith.constant dense<0xFF800000> : vector<1x16xf32>
    %18 = vector.multi_reduction <maximumf>, %17, %cst_14 [2] : vector<1x16x16xf32> to vector<1x16xf32>
    %19 = vector.shape_cast %18 : vector<1x16xf32> to vector<1x16x1xf32>
    %20 = vector.broadcast %19 : vector<1x16x1xf32> to vector<1x16x16xf32>
    %21 = arith.subf %17, %20 : vector<1x16x16xf32>
    %22 = math.exp %21 : vector<1x16x16xf32>
    %cst_15 = arith.constant dense<0.000000e+00> : vector<1x16xf32>
    %23 = vector.multi_reduction <add>, %22, %cst_15 [2] : vector<1x16x16xf32> to vector<1x16xf32>
    %24 = vector.shape_cast %23 : vector<1x16xf32> to vector<1x16x1xf32>
    %25 = tpu.reciprocal %24 {approx = true} : vector<1x16x1xf32> -> vector<1x16x1xf32>
    %26 = vector.broadcast %25 : vector<1x16x1xf32> to vector<1x16x16xf32>
    %27 = arith.mulf %22, %26 : vector<1x16x16xf32>
    %28 = arith.truncf %27 : vector<1x16x16xf32> to vector<1x16x16xbf16>
    "tpu.trace_start"() <{level = 10 : i32, message = "bqk,bkd->bqd"}> : () -> ()
    %cst_16 = arith.constant dense<0.000000e+00> : vector<1x16x32xf32>
    %29 = tpu.matmul %28, %16, %cst_16 {dimension_numbers = #tpu.dot_dimension_numbers<[2], [1], [1], [2], [0, 0, 0, 1, 1, 2], [0], [0]>} : vector<1x16x16xbf16>, vector<1x16x32xbf16>, vector<1x16x32xf32> -> vector<1x16x32xf32>
    "tpu.trace_stop"() : () -> ()
    %30 = arith.truncf %29 : vector<1x16x32xf32> to vector<1x16x32xbf16>
    %31 = vector.shape_cast %30 : vector<1x16x32xbf16> to vector<16x32xbf16>
    %c0_17 = arith.constant 0 : index
    %c0_18 = arith.constant 0 : index
    %32 = vector.load %arg6[%c0_17, %c0_18] : memref<32x16xbf16, #tpu.memory_space<vmem>>, vector<32x16xbf16>
    %cst_19 = arith.constant dense<0.000000e+00> : vector<16x16xf32>
    %33 = tpu.matmul %31, %32, %cst_19 {dimension_numbers = #tpu.dot_dimension_numbers<[1], [0], [0], [1], [0, 0, 1, 1], [], []>} : vector<16x32xbf16>, vector<32x16xbf16>, vector<16x16xf32> -> vector<16x16xf32>
    %34 = vector.shape_cast %33 : vector<16x16xf32> to vector<1x16x16xf32>
    %35 = arith.truncf %34 : vector<1x16x16xf32> to vector<1x16x16xbf16>
    "tpu.trace_start"() <{level = 10 : i32, message = "bij,bjh->bih"}> : () -> ()
    %cst_20 = arith.constant dense<0.000000e+00> : vector<1x16x16xf32>
    %36 = tpu.matmul %3, %35, %cst_20 {dimension_numbers = #tpu.dot_dimension_numbers<[2], [1], [1], [2], [0, 0, 0, 1, 1, 2], [0], [0]>} : vector<1x16x16xbf16>, vector<1x16x16xbf16>, vector<1x16x16xf32> -> vector<1x16x16xf32>
    "tpu.trace_stop"() : () -> ()
    %c0_21 = arith.constant 0 : index
    %c0_22 = arith.constant 0 : index
    %37 = vector.load %arg7[%c0_21, %c0_22] : memref<1x16xf32, #tpu.memory_space<vmem>>, vector<1x16xf32>
    %38 = vector.shape_cast %37 : vector<1x16xf32> to vector<1x1x16xf32>
    %39 = vector.broadcast %38 : vector<1x1x16xf32> to vector<1x16x16xf32>
    %40 = arith.addf %36, %39 : vector<1x16x16xf32>
    %cst_23 = arith.constant 0.000000e+00 : f32
    %41 = vector.broadcast %cst_23 : f32 to vector<1x16x16xf32>
    %42 = arith.maximumf %40, %41 : vector<1x16x16xf32>
    %43 = arith.truncf %42 : vector<1x16x16xf32> to vector<1x16x16xbf16>
    %44 = vector.shape_cast %43 : vector<1x16x16xbf16> to vector<16x16xbf16>
    %c0_24 = arith.constant 0 : index
    %c0_25 = arith.constant 0 : index
    %45 = vector.load %arg8[%c0_24, %c0_25] : memref<16x32xbf16, #tpu.memory_space<vmem>>, vector<16x32xbf16>
    %cst_26 = arith.constant dense<0.000000e+00> : vector<16x32xf32>
    %46 = tpu.matmul %44, %45, %cst_26 {dimension_numbers = #tpu.dot_dimension_numbers<[1], [0], [0], [1], [0, 0, 1, 1], [], []>} : vector<16x16xbf16>, vector<16x32xbf16>, vector<16x32xf32> -> vector<16x32xf32>
    %47 = vector.shape_cast %46 : vector<16x32xf32> to vector<1x16x32xf32>
    %48 = arith.truncf %47 : vector<1x16x32xf32> to vector<1x16x32xbf16>
    "tpu.trace_start"() <{level = 10 : i32, message = "bij,bjd->bid"}> : () -> ()
    %cst_27 = arith.constant dense<0.000000e+00> : vector<1x16x32xf32>
    %49 = tpu.matmul %3, %48, %cst_27 {dimension_numbers = #tpu.dot_dimension_numbers<[2], [1], [1], [2], [0, 0, 0, 1, 1, 2], [0], [0]>} : vector<1x16x16xbf16>, vector<1x16x32xbf16>, vector<1x16x32xf32> -> vector<1x16x32xf32>
    "tpu.trace_stop"() : () -> ()
    %c0_28 = arith.constant 0 : index
    %c0_29 = arith.constant 0 : index
    %50 = vector.load %arg9[%c0_28, %c0_29] : memref<1x32xf32, #tpu.memory_space<vmem>>, vector<1x32xf32>
    %51 = vector.shape_cast %50 : vector<1x32xf32> to vector<1x1x32xf32>
    %52 = vector.broadcast %51 : vector<1x1x32xf32> to vector<1x16x32xf32>
    %53 = arith.addf %49, %52 : vector<1x16x32xf32>
    %c0_30 = arith.constant 0 : index
    %c0_31 = arith.constant 0 : index
    %c0_32 = arith.constant 0 : index
    %54 = vector.load %arg10[%c0_30, %c0_31, %c0_32] : memref<1x16x32xf32, #tpu.memory_space<vmem>>, vector<1x16x32xf32>
    tpu.vector_store %arg10[%c0_30, %c0_31, %c0_32], %53 {strides = array<i32>} : memref<1x16x32xf32, #tpu.memory_space<vmem>>, vector<1x16x32xf32>,
    return
  }
  func.func @transform_0(%arg0: i32) -> (i32, i32, i32) {
    %c0_i32 = arith.constant 0 : i32
    %c0_i32_0 = arith.constant 0 : i32
    %c0_i32_1 = arith.constant 0 : i32
    return %arg0, %c0_i32, %c0_i32_0 : i32, i32, i32
  }
  func.func @transform_1(%arg0: i32) -> (i32, i32, i32) {
    %c0_i32 = arith.constant 0 : i32
    %c0_i32_0 = arith.constant 0 : i32
    %c0_i32_1 = arith.constant 0 : i32
    return %arg0, %c0_i32, %c0_i32_0 : i32, i32, i32
  }
  func.func @transform_2(%arg0: i32) -> (i32, i32) {
    %c0_i32 = arith.constant 0 : i32
    %c0_i32_0 = arith.constant 0 : i32
    %c0_i32_1 = arith.constant 0 : i32
    return %c0_i32, %c0_i32_0 : i32, i32
  }
  func.func @transform_3(%arg0: i32) -> (i32, i32) {
    %c0_i32 = arith.constant 0 : i32
    %c0_i32_0 = arith.constant 0 : i32
    %c0_i32_1 = arith.constant 0 : i32
    return %c0_i32, %c0_i32_0 : i32, i32
  }
  func.func @transform_4(%arg0: i32) -> (i32, i32) {
    %c0_i32 = arith.constant 0 : i32
    %c0_i32_0 = arith.constant 0 : i32
    %c0_i32_1 = arith.constant 0 : i32
    return %c0_i32, %c0_i32_0 : i32, i32
  }
  func.func @transform_5(%arg0: i32) -> (i32, i32) {
    %c0_i32 = arith.constant 0 : i32
    %c0_i32_0 = arith.constant 0 : i32
    %c0_i32_1 = arith.constant 0 : i32
    return %c0_i32, %c0_i32_0 : i32, i32
  }
  func.func @transform_6(%arg0: i32) -> (i32, i32) {
    %c0_i32 = arith.constant 0 : i32
    %c0_i32_0 = arith.constant 0 : i32
    %c0_i32_1 = arith.constant 0 : i32
    return %c0_i32, %c0_i32_0 : i32, i32
  }
  func.func @transform_7(%arg0: i32) -> (i32, i32) {
    %c0_i32 = arith.constant 0 : i32
    %c0_i32_0 = arith.constant 0 : i32
    %c0_i32_1 = arith.constant 0 : i32
    return %c0_i32, %c0_i32_0 : i32, i32
  }
  func.func @transform_8(%arg0: i32) -> (i32, i32) {
    %c0_i32 = arith.constant 0 : i32
    %c0_i32_0 = arith.constant 0 : i32
    %c0_i32_1 = arith.constant 0 : i32
    return %c0_i32, %c0_i32_0 : i32, i32
  }
  func.func @transform_9(%arg0: i32) -> (i32, i32, i32) {
    %c0_i32 = arith.constant 0 : i32
    %c0_i32_0 = arith.constant 0 : i32
    %c0_i32_1 = arith.constant 0 : i32
    return %arg0, %c0_i32, %c0_i32_0 : i32, i32, i32
  }
}

</mosaic_0001>

<llo_original>
// kernel: tpu_custom_call.1
$region0: #{tpu_custom_call.1}
  #allocation0 [shape = 'u32[]', space=smem, size = 0x4, offset = 0x4, fixed_abs, tag = 'smem constant byte address 0x4 - core index']
  #allocation1 [shape = 'u32[72,128]{1,0:T(1,128)}', space=vmem, size = 0x9000, scoped, tag = 'internal scratch']
  %s0 = inlined_call_operand.hbm [shape: f32[2,16,32], index: 0, kind: input, shape index: {}]
  %s1 = inlined_call_operand.hbm [shape: f32[2,16,16], index: 1, kind: input, shape index: {}]
  %s2 = inlined_call_operand.vmem [shape: bf16[32,32], index: 2, kind: input, shape index: {}]
  %s3 = inlined_call_operand.hbm [shape: bf16[32,32], index: 3, kind: input, shape index: {}]
  %s4 = inlined_call_operand.hbm [shape: bf16[32,32], index: 4, kind: input, shape index: {}]
  %s5 = inlined_call_operand.vmem [shape: bf16[32,16], index: 5, kind: input, shape index: {}]
  %s6 = inlined_call_operand.vmem [shape: f32[1,16], index: 6, kind: input, shape index: {}]
  %s7 = inlined_call_operand.vmem [shape: bf16[16,32], index: 7, kind: input, shape index: {}]
  %s8 = inlined_call_operand.vmem [shape: f32[1,32], index: 8, kind: input, shape index: {}]
  %s9 = inlined_call_operand.hbm [shape: f32[2,16,32], index: 9, kind: output, shape index: {}]
  %s10 = sld [smem:[#allocation0]]
  $region85: #{tpu_custom_call.1} parent=0
    _
  %s12 = ssub.s32 1, %s10
  %s13 = scalar_select 0, %s12, %s10
  $region1: #{tpu_custom_call.1} parent=0
    #allocation2 [shape = 'u8[16384]{0}', space=vmem, size = 0x4000, scoped, tag = 'input window, operand 0']
    #allocation3 [shape = 's32[2]{0}', space=sflag, size = 0x8, scoped, tag = 'scoped memory for tpu_custom_call.1']
    #allocation4 [shape = 's32[2]{0}', space=sflag, size = 0x8, scoped, tag = 'scoped memory for tpu_custom_call.1']
    #allocation5 [shape = 'u8[16384]{0}', space=vmem, size = 0x4000, scoped, tag = 'input window, operand 1']
    #allocation6 [shape = 's32[2]{0}', space=sflag, size = 0x8, scoped, tag = 'scoped memory for tpu_custom_call.1']
    #allocation7 [shape = 'u8[8192]{0}', space=vmem, size = 0x2000, scoped, tag = 'input window, operand 3, single buffered']
    #allocation8 [shape = 'u8[8192]{0}', space=vmem, size = 0x2000, scoped, tag = 'input window, operand 4, single buffered']
    #allocation9 [shape = 's32[1]{0}', space=sflag, size = 0x4, scoped, tag = 'scoped memory for tpu_custom_call.1']
    #allocation10 [shape = 'u8[16384]{0}', space=vmem, size = 0x4000, scoped, tag = 'output window, operand 0']
    %14 = vsyncpa [#allocation3], 0
    %s15 = scalar_lea.sflag [#allocation3], 1
    %16 = vsyncpa %s15, 0
    %17 = vsyncpa [#allocation6], 0
    %s18 = scalar_lea.sflag [#allocation6], 1
    %19 = vsyncpa %s18, 0
    %20 = vsyncpa [#allocation9], 0
    %21 = vsyncpa [#allocation4], 0
    %s22 = scalar_lea.sflag [#allocation4], 1
    %23 = vsyncpa %s22, 0
    loop: start=0, step=1, limit=4
    $region2: #{tpu_custom_call.1} parent=1 // loop_pre_header
      _
    $region3: #{tpu_custom_call.1} parent=1 // loop_header
      %s25 = sphi 0, %s29
      %p26 = scmp.ge.s32.totalorder %s25, 4
      %s35 = sphi 0, %s37
      %s38 = sphi 0, %s35
      %s39 = sphi 0, %s38
      %s55 = sphi 0, %s39
      %s61 = sphi 0, %s63
      %s64 = sphi 0, %s61
      %s65 = sphi 0, %s64
      %s81 = sphi 0, %s65
      %s85 = sphi 0, %s85
      %s87 = sphi 0, %s85
      %s88 = sphi 0, %s87
      %s102 = sphi 0, %s88
      %s106 = sphi 0, %s106
      %s108 = sphi 0, %s106
      %s109 = sphi 0, %s108
      %s123 = sphi 0, %s109
      %s127 = sphi 0, %s127
      %s129 = sphi 0, %s127
      %s130 = sphi 0, %s129
      %s144 = sphi 0, %s130
      %s148 = sphi 0, %s148
      %s150 = sphi 0, %s148
      %s151 = sphi 0, %s150
      %s165 = sphi 0, %s151
      %s169 = sphi 0, %s169
      %s171 = sphi 0, %s169
      %s172 = sphi 0, %s171
      %s186 = sphi 0, %s172
      %s190 = sphi 0, %s190
      %s192 = sphi 0, %s190
      %s193 = sphi 0, %s192
      %s207 = sphi 0, %s193
      %s211 = sphi 0, %s211
      %s213 = sphi 0, %s211
      %s214 = sphi 0, %s213
      %s228 = sphi 0, %s214
      %s234 = sphi 0, %s236
      %s237 = sphi 0, %s234
      %s238 = sphi 0, %s237
      %s254 = sphi 0, %s238
    $region4: #{tpu_custom_call.1} parent=1 // loop_header_branch
      %28 = sbr.rel (%p26) target = $region8
    $region5: #{tpu_custom_call.1} parent=1 // loop_body
      %s30 = ssub.s32 %s25, 1
      %s31 = ssub.s32 %s25, 2
      %s32 = sadd.s32 %s25, 1
      %s33 = ssub.s32 %s25, %s32
      %p34 = scmp.eq.s32.totalorder %s33, 0
      %s36 = sadd.s32 %s35, 1
      %s37 = scalar_select %p34, %s35, %s36
      %p40 = pneg %p34
      %p41 = scmp.eq.s32.totalorder %s25, 1
      %p42 = por %p40, %p41
      %p43 = scmp.ne.s32.totalorder %s35, %s38
      %p44 = scmp.eq.s32.totalorder %s25, 0
      %p45 = por %p43, %p44
      %p46 = scmp.ne.s32.totalorder %s35, %s38
      %p47 = scmp.eq.s32.totalorder %s30, 1
      %p48 = por %p46, %p47
      %p49 = scmp.ne.s32.totalorder %s38, %s39
      %p50 = scmp.eq.s32.totalorder %s30, 0
      %p51 = por %p49, %p50
      %p52 = scmp.ne.s32.totalorder %s38, %s39
      %p53 = scmp.eq.s32.totalorder %s31, 1
      %p54 = por %p52, %p53
      %p56 = scmp.ne.s32.totalorder %s39, %s55
      %p57 = scmp.eq.s32.totalorder %s31, 0
      %p58 = por %p56, %p57
      %s59 = ssub.s32 %s25, %s32
      %p60 = scmp.eq.s32.totalorder %s59, 0
      %s62 = sadd.s32 %s61, 1
      %s63 = scalar_select %p60, %s61, %s62
      %p66 = pneg %p60
      %p67 = scmp.eq.s32.totalorder %s25, 1
      %p68 = por %p66, %p67
      %p69 = scmp.ne.s32.totalorder %s61, %s64
      %p70 = scmp.eq.s32.totalorder %s25, 0
      %p71 = por %p69, %p70
      %p72 = scmp.ne.s32.totalorder %s61, %s64
      %p73 = scmp.eq.s32.totalorder %s30, 1
      %p74 = por %p72, %p73
      %p75 = scmp.ne.s32.totalorder %s64, %s65
      %p76 = scmp.eq.s32.totalorder %s30, 0
      %p77 = por %p75, %p76
      %p78 = scmp.ne.s32.totalorder %s64, %s65
      %p79 = scmp.eq.s32.totalorder %s31, 1
      %p80 = por %p78, %p79
      %p82 = scmp.ne.s32.totalorder %s65, %s81
      %p83 = scmp.eq.s32.totalorder %s31, 0
      %p84 = por %p82, %p83
      %s86 = sadd.s32 %s85, 1
      %p89 = scmp.eq.s32.totalorder %s25, 1
      %p90 = scmp.ne.s32.totalorder %s85, %s87
      %p91 = scmp.eq.s32.totalorder %s25, 0
      %p92 = por %p90, %p91
      %p93 = scmp.ne.s32.totalorder %s85, %s87
      %p94 = scmp.eq.s32.totalorder %s30, 1
      %p95 = por %p93, %p94
      %p96 = scmp.ne.s32.totalorder %s87, %s88
      %p97 = scmp.eq.s32.totalorder %s30, 0
      %p98 = por %p96, %p97
      %p99 = scmp.ne.s32.totalorder %s87, %s88
      %p100 = scmp.eq.s32.totalorder %s31, 1
      %p101 = por %p99, %p100
      %p103 = scmp.ne.s32.totalorder %s88, %s102
      %p104 = scmp.eq.s32.totalorder %s31, 0
      %p105 = por %p103, %p104
      %s107 = sadd.s32 %s106, 1
      %p110 = scmp.eq.s32.totalorder %s25, 1
      %p111 = scmp.ne.s32.totalorder %s106, %s108
      %p112 = scmp.eq.s32.totalorder %s25, 0
      %p113 = por %p111, %p112
      %p114 = scmp.ne.s32.totalorder %s106, %s108
      %p115 = scmp.eq.s32.totalorder %s30, 1
      %p116 = por %p114, %p115
      %p117 = scmp.ne.s32.totalorder %s108, %s109
      %p118 = scmp.eq.s32.totalorder %s30, 0
      %p119 = por %p117, %p118
      %p120 = scmp.ne.s32.totalorder %s108, %s109
      %p121 = scmp.eq.s32.totalorder %s31, 1
      %p122 = por %p120, %p121
      %p124 = scmp.ne.s32.totalorder %s109, %s123
      %p125 = scmp.eq.s32.totalorder %s31, 0
      %p126 = por %p124, %p125
      %s128 = sadd.s32 %s127, 1
      %p131 = scmp.eq.s32.totalorder %s25, 1
      %p132 = scmp.ne.s32.totalorder %s127, %s129
      %p133 = scmp.eq.s32.totalorder %s25, 0
      %p134 = por %p132, %p133
      %p135 = scmp.ne.s32.totalorder %s127, %s129
      %p136 = scmp.eq.s32.totalorder %s30, 1
      %p137 = por %p135, %p136
      %p138 = scmp.ne.s32.totalorder %s129, %s130
      %p139 = scmp.eq.s32.totalorder %s30, 0
      %p140 = por %p138, %p139
      %p141 = scmp.ne.s32.totalorder %s129, %s130
      %p142 = scmp.eq.s32.totalorder %s31, 1
      %p143 = por %p141, %p142
      %p145 = scmp.ne.s32.totalorder %s130, %s144
      %p146 = scmp.eq.s32.totalorder %s31, 0
      %p147 = por %p145, %p146
      %s149 = sadd.s32 %s148, 1
      %p152 = scmp.eq.s32.totalorder %s25, 1
      %p153 = scmp.ne.s32.totalorder %s148, %s150
      %p154 = scmp.eq.s32.totalorder %s25, 0
      %p155 = por %p153, %p154
      %p156 = scmp.ne.s32.totalorder %s148, %s150
      %p157 = scmp.eq.s32.totalorder %s30, 1
      %p158 = por %p156, %p157
      %p159 = scmp.ne.s32.totalorder %s150, %s151
      %p160 = scmp.eq.s32.totalorder %s30, 0
      %p161 = por %p159, %p160
      %p162 = scmp.ne.s32.totalorder %s150, %s151
      %p163 = scmp.eq.s32.totalorder %s31, 1
      %p164 = por %p162, %p163
      %p166 = scmp.ne.s32.totalorder %s151, %s165
      %p167 = scmp.eq.s32.totalorder %s31, 0
      %p168 = por %p166, %p167
      %s170 = sadd.s32 %s169, 1
      %p173 = scmp.eq.s32.totalorder %s25, 1
      %p174 = scmp.ne.s32.totalorder %s169, %s171
      %p175 = scmp.eq.s32.totalorder %s25, 0
      %p176 = por %p174, %p175
      %p177 = scmp.ne.s32.totalorder %s169, %s171
      %p178 = scmp.eq.s32.totalorder %s30, 1
      %p179 = por %p177, %p178
      %p180 = scmp.ne.s32.totalorder %s171, %s172
      %p181 = scmp.eq.s32.totalorder %s30, 0
      %p182 = por %p180, %p181
      %p183 = scmp.ne.s32.totalorder %s171, %s172
      %p184 = scmp.eq.s32.totalorder %s31, 1
      %p185 = por %p183, %p184
      %p187 = scmp.ne.s32.totalorder %s172, %s186
      %p188 = scmp.eq.s32.totalorder %s31, 0
      %p189 = por %p187, %p188
      %s191 = sadd.s32 %s190, 1
      %p194 = scmp.eq.s32.totalorder %s25, 1
      %p195 = scmp.ne.s32.totalorder %s190, %s192
      %p196 = scmp.eq.s32.totalorder %s25, 0
      %p197 = por %p195, %p196
      %p198 = scmp.ne.s32.totalorder %s190, %s192
      %p199 = scmp.eq.s32.totalorder %s30, 1
      %p200 = por %p198, %p199
      %p201 = scmp.ne.s32.totalorder %s192, %s193
      %p202 = scmp.eq.s32.totalorder %s30, 0
      %p203 = por %p201, %p202
      %p204 = scmp.ne.s32.totalorder %s192, %s193
      %p205 = scmp.eq.s32.totalorder %s31, 1
      %p206 = por %p204, %p205
      %p208 = scmp.ne.s32.totalorder %s193, %s207
      %p209 = scmp.eq.s32.totalorder %s31, 0
      %p210 = por %p208, %p209
      %s212 = sadd.s32 %s211, 1
      %p215 = scmp.eq.s32.totalorder %s25, 1
      %p216 = scmp.ne.s32.totalorder %s211, %s213
      %p217 = scmp.eq.s32.totalorder %s25, 0
      %p218 = por %p216, %p217
      %p219 = scmp.ne.s32.totalorder %s211, %s213
      %p220 = scmp.eq.s32.totalorder %s30, 1
      %p221 = por %p219, %p220
      %p222 = scmp.ne.s32.totalorder %s213, %s214
      %p223 = scmp.eq.s32.totalorder %s30, 0
      %p224 = por %p222, %p223
      %p225 = scmp.ne.s32.totalorder %s213, %s214
      %p226 = scmp.eq.s32.totalorder %s31, 1
      %p227 = por %p225, %p226
      %p229 = scmp.ne.s32.totalorder %s214, %s228
      %p230 = scmp.eq.s32.totalorder %s31, 0
      %p231 = por %p229, %p230
      %s232 = ssub.s32 %s25, %s32
      %p233 = scmp.eq.s32.totalorder %s232, 0
      %s235 = sadd.s32 %s234, 1
      %s236 = scalar_select %p233, %s234, %s235
      %p239 = pneg %p233
      %p240 = scmp.eq.s32.totalorder %s25, 1
      %p241 = por %p239, %p240
      %p242 = scmp.ne.s32.totalorder %s234, %s237
      %p243 = scmp.eq.s32.totalorder %s25, 0
      %p244 = por %p242, %p243
      %p245 = scmp.ne.s32.totalorder %s234, %s237
      %p246 = scmp.eq.s32.totalorder %s30, 1
      %p247 = por %p245, %p246
      %p248 = scmp.ne.s32.totalorder %s237, %s238
      %p249 = scmp.eq.s32.totalorder %s30, 0
      %p250 = por %p248, %p249
      %p251 = scmp.ne.s32.totalorder %s237, %s238
      %p252 = scmp.eq.s32.totalorder %s31, 1
      %p253 = por %p251, %p252
      %p255 = scmp.ne.s32.totalorder %s238, %s254
      %p256 = scmp.eq.s32.totalorder %s31, 0
      %p257 = por %p255, %p256
      %p258 = scmp.le.s32.totalorder 1, %s25
      %p259 = scmp.lt.s32.totalorder %s25, 3
      %p260 = pnand %p258, %p259
      %p261 = pneg %p260
      // Predicated region
      $region9: #{tpu_custom_call.1} parent=5 // pred_check
        _
      $region10: #{tpu_custom_call.1} parent=5 // pred_check_branch
        %263 = sbr.rel (%p260) target = $region12
      $region11: #{tpu_custom_call.1} parent=5 // pred_region
        %s264 = ssub.s32 %s25, 1
        // Predicated region
        $region13: #{tpu_custom_call.1} parent=11 // pred_check
          %p265 = pneg %p98
        $region14: #{tpu_custom_call.1} parent=11 // pred_check_branch
          %267 = sbr.rel (%p265) target = $region16
        $region15: #{tpu_custom_call.1} parent=11 // pred_region
          _
        $region16: #{tpu_custom_call.1} parent=11 // pred_fallthru
          _
        // Predicated region
        $region17: #{tpu_custom_call.1} parent=11 // pred_check
          %p268 = pneg %p119
        $region18: #{tpu_custom_call.1} parent=11 // pred_check_branch
          %270 = sbr.rel (%p268) target = $region20
        $region19: #{tpu_custom_call.1} parent=11 // pred_region
          %272 = vsyncadd [#allocation6], 0
          %s273 = sshll.u32 %s3, 4
          %s274 = int_to_ptr.hbm [resolvable:$true] %s273
          %s275 = sshll.u32 [#allocation7], 4
          %s276 = int_to_ptr.vmem [resolvable:$true] %s275
          %281 = dma.hbm_to_vmem [thread:$0]  %s274, 256, %s276, [#allocation6], 64, 64, 4
        $region20: #{tpu_custom_call.1} parent=11 // pred_fallthru
          _
        // Predicated region
        $region21: #{tpu_custom_call.1} parent=11 // pred_check
          %p282 = pneg %p140
        $region22: #{tpu_custom_call.1} parent=11 // pred_check_branch
          %284 = sbr.rel (%p282) target = $region24
        $region23: #{tpu_custom_call.1} parent=11 // pred_region
          %286 = vsyncadd [#allocation9], 0
          %s287 = sshll.u32 %s4, 4
          %s288 = int_to_ptr.hbm [resolvable:$true] %s287
          %s289 = sshll.u32 [#allocation8], 4
          %s290 = int_to_ptr.vmem [resolvable:$true] %s289
          %295 = dma.hbm_to_vmem [thread:$0]  %s288, 256, %s290, [#allocation9], 64, 64, 4
        $region24: #{tpu_custom_call.1} parent=11 // pred_fallthru
          _
        // Predicated region
        $region25: #{tpu_custom_call.1} parent=11 // pred_check
          %p296 = pneg %p161
        $region26: #{tpu_custom_call.1} parent=11 // pred_check_branch
          %298 = sbr.rel (%p296) target = $region28
        $region27: #{tpu_custom_call.1} parent=11 // pred_region
          _
        $region28: #{tpu_custom_call.1} parent=11 // pred_fallthru
          _
        // Predicated region
        $region29: #{tpu_custom_call.1} parent=11 // pred_check
          %p299 = pneg %p182
        $region30: #{tpu_custom_call.1} parent=11 // pred_check_branch
          %301 = sbr.rel (%p299) target = $region32
        $region31: #{tpu_custom_call.1} parent=11 // pred_region
          _
        $region32: #{tpu_custom_call.1} parent=11 // pred_fallthru
          _
        // Predicated region
        $region33: #{tpu_custom_call.1} parent=11 // pred_check
          %p302 = pneg %p203
        $region34: #{tpu_custom_call.1} parent=11 // pred_check_branch
          %304 = sbr.rel (%p302) target = $region36
        $region35: #{tpu_custom_call.1} parent=11 // pred_region
          _
        $region36: #{tpu_custom_call.1} parent=11 // pred_fallthru
          _
        // Predicated region
        $region37: #{tpu_custom_call.1} parent=11 // pred_check
          %p305 = pneg %p224
        $region38: #{tpu_custom_call.1} parent=11 // pred_check_branch
          %307 = sbr.rel (%p305) target = $region40
        $region39: #{tpu_custom_call.1} parent=11 // pred_region
          _
        $region40: #{tpu_custom_call.1} parent=11 // pred_fallthru
          _
      $region12: #{tpu_custom_call.1} parent=5 // pred_fallthru
        _
      %p308 = scmp.lt.s32.totalorder %s25, 2
      // Predicated region
      $region41: #{tpu_custom_call.1} parent=5 // pred_check
        %p309 = pneg %p308
      $region42: #{tpu_custom_call.1} parent=5 // pred_check_branch
        %311 = sbr.rel (%p309) target = $region44
      $region43: #{tpu_custom_call.1} parent=5 // pred_region
        // Predicated region
        $region45: #{tpu_custom_call.1} parent=43 // pred_check
          %p312 = pneg %p45
        $region46: #{tpu_custom_call.1} parent=43 // pred_check_branch
          %314 = sbr.rel (%p312) target = $region48
        $region47: #{tpu_custom_call.1} parent=43 // pred_region
          %s315 = sand.u32 %s35, 1
          %s316 = scalar_lea.sflag [#allocation3], %s315
          %s317 = sand.u32 %s35, 1
          %s318 = smul.addr %s317, 16
          %s319 = scalar_lea.vmem [#allocation2], %s318
          %321 = vsyncadd %s316, 0
          %s322 = smul.addr %s25, 2
          %s323 = smul.addr %s322, 8
          %s324 = scalar_lea.hbm %s0, %s323
          %s325 = sshll.u32 %s324, 4
          %s326 = int_to_ptr.hbm [resolvable:$true] %s325
          %s327 = sshll.u32 %s319, 4
          %s328 = int_to_ptr.vmem [resolvable:$true] %s327
          %333 = dma.hbm_to_vmem [thread:$0]  %s326, 256, %s328, %s316, 128, 128, 8
        $region48: #{tpu_custom_call.1} parent=43 // pred_fallthru
          _
        // Predicated region
        $region49: #{tpu_custom_call.1} parent=43 // pred_check
          %p334 = pneg %p71
        $region50: #{tpu_custom_call.1} parent=43 // pred_check_branch
          %336 = sbr.rel (%p334) target = $region52
        $region51: #{tpu_custom_call.1} parent=43 // pred_region
          %s337 = sand.u32 %s25, 1
          %s338 = scalar_lea.sflag [#allocation6], %s337
          %s339 = sand.u32 %s61, 1
          %s340 = smul.addr %s339, 16
          %s341 = scalar_lea.vmem [#allocation5], %s340
          %343 = vsyncadd %s338, 0
          %s344 = smul.addr %s25, 2
          %s345 = smul.addr %s344, 8
          %s346 = scalar_lea.hbm %s1, %s345
          %s347 = sshll.u32 %s346, 4
          %s348 = int_to_ptr.hbm [resolvable:$true] %s347
          %s349 = sshll.u32 %s341, 4
          %s350 = int_to_ptr.vmem [resolvable:$true] %s349
          %355 = dma.hbm_to_vmem [thread:$0]  %s348, 256, %s350, %s338, 128, 128, 8
        $region52: #{tpu_custom_call.1} parent=43 // pred_fallthru
          _
      $region44: #{tpu_custom_call.1} parent=5 // pred_fallthru
        _
      %p356 = scmp.le.s32.totalorder 1, %s25
      %p357 = scmp.lt.s32.totalorder %s25, 3
      %p358 = pnand %p356, %p357
      %p359 = pneg %p358
      // Predicated region
      $region53: #{tpu_custom_call.1} parent=5 // pred_check
        _
      $region54: #{tpu_custom_call.1} parent=5 // pred_check_branch
        %361 = sbr.rel (%p358) target = $region56
      $region55: #{tpu_custom_call.1} parent=5 // pred_region
        %s362 = ssub.s32 %s25, 1
        %s363 = sand.u32 %s38, 1
        %s364 = scalar_lea.sflag [#allocation3], %s363
        %s365 = sand.u32 %s38, 1
        %s366 = smul.addr %s365, 16
        %s367 = scalar_lea.vmem [#allocation2], %s366
        // Predicated region
        $region57: #{tpu_custom_call.1} parent=55 // pred_check
          %p368 = pneg %p51
        $region58: #{tpu_custom_call.1} parent=55 // pred_check_branch
          %370 = sbr.rel (%p368) target = $region60
        $region59: #{tpu_custom_call.1} parent=55 // pred_region
          %372 = dma.done %s364, 256
        $region60: #{tpu_custom_call.1} parent=55 // pred_fallthru
          _
        %s373 = sand.u32 %s30, 1
        %s374 = scalar_lea.sflag [#allocation6], %s373
        %s375 = sand.u32 %s64, 1
        %s376 = smul.addr %s375, 16
        %s377 = scalar_lea.vmem [#allocation5], %s376
        // Predicated region
        $region61: #{tpu_custom_call.1} parent=55 // pred_check
          %p378 = pneg %p77
        $region62: #{tpu_custom_call.1} parent=55 // pred_check_branch
          %380 = sbr.rel (%p378) target = $region64
        $region63: #{tpu_custom_call.1} parent=55 // pred_region
          %382 = dma.done %s374, 256
        $region64: #{tpu_custom_call.1} parent=55 // pred_fallthru
          _
        // Predicated region
        $region65: #{tpu_custom_call.1} parent=55 // pred_check
          %p383 = pneg %p119
        $region66: #{tpu_custom_call.1} parent=55 // pred_check_branch
          %385 = sbr.rel (%p383) target = $region68
        $region67: #{tpu_custom_call.1} parent=55 // pred_region
          %387 = dma.done [#allocation6], 256
        $region68: #{tpu_custom_call.1} parent=55 // pred_fallthru
          _
        // Predicated region
        $region69: #{tpu_custom_call.1} parent=55 // pred_check
          %p388 = pneg %p140
        $region70: #{tpu_custom_call.1} parent=55 // pred_check_branch
          %390 = sbr.rel (%p388) target = $region72
        $region71: #{tpu_custom_call.1} parent=55 // pred_region
          %392 = dma.done [#allocation9], 256
        $region72: #{tpu_custom_call.1} parent=55 // pred_fallthru
          _
        %s393 = sand.u32 %s38, 1
        %s394 = scalar_lea.sflag [#allocation3], %s393
        %s395 = sand.u32 %s38, 1
        %s396 = smul.addr %s395, 16
        %s397 = scalar_lea.vmem [#allocation2], %s396
        %p398 = pneg %p51
        %p399 = pneg %p48
        %s400 = sand.u32 %s30, 1
        %s401 = scalar_lea.sflag [#allocation6], %s400
        %s402 = sand.u32 %s64, 1
        %s403 = smul.addr %s402, 16
        %s404 = scalar_lea.vmem [#allocation5], %s403
        %p405 = pneg %p77
        %p406 = pneg %p74
        %p407 = pneg %p98
        %p408 = pneg %p95
        %p409 = pneg %p119
        %p410 = pneg %p116
        %p411 = pneg %p140
        %p412 = pneg %p137
        %p413 = pneg %p161
        %p414 = pneg %p158
        %p415 = pneg %p182
        %p416 = pneg %p179
        %p417 = pneg %p203
        %p418 = pneg %p200
        %p419 = pneg %p224
        %p420 = pneg %p221
        %p421 = pneg %p250
        %p422 = pneg %p247
        %s423 = sand.u32 %s237, 1
        %s424 = scalar_lea.sflag [#allocation4], %s423
        %s425 = sand.u32 %s237, 1
        %s426 = smul.addr %s425, 16
        %s427 = scalar_lea.vmem [#allocation10], %s426
        %v429 = vld [vmem:[%s367] sm:$0xff]
        %v430 = vld [vmem:[%s367 + $0x8] sm:$0xff]
        %v431 = vpack.c.bf16 %v429, %v429
        %v432 = vpack.c.bf16 %v430, %v430
        %v433 = vld [vmem:[%s377] sm:$0xff]
        %v434 = vld [vmem:[%s377 + $0x8] sm:$0xff]
        %v435 = vpack.c.bf16 %v433, %v433
        %v436 = vpack.c.bf16 %v434, %v434
        %v437 = vld [vmem:[%s2] sm:$0xf]
        %v438 = vld [vmem:[%s2 + $0x4] sm:$0xf]
        %v439 = vld [vmem:[%s2 + $0x8] sm:$0xf]
        %v440 = vld [vmem:[%s2 + $0xc] sm:$0xf]
        %v443 = vunpack.c.l.b16 %v431
        %v444 = vunpack.c.l.b16 %v432
        %v445 = vpack.c.b16 %v444, %v443
        %v450 = vunpack.c.l.b16 %v437
        %v451 = vunpack.c.l.b16 %v438
        %v452 = vunpack.c.l.b16 %v439
        %v453 = vunpack.c.l.b16 %v440
        %v454 = vpack.c.b16 %v451, %v450
        %v455 = vpack.c.b16 %v453, %v452
        %vm458 = vcmask 261120
        %v460 = vsel %vm458, %v445, 0
        %462 = vmatpush.bf16.msra.mxu0 0
        %463 = vmatpush.bf16.msra.mxu0 0
        %464 = vmatpush.bf16.msra.mxu0 0
        %465 = vmatpush.bf16.msra.mxu0 0
        %466 = vmatpush.bf16.msra.mxu0 0
        %467 = vmatpush.bf16.msra.mxu0 0
        %468 = vmatpush.bf16.msra.mxu0 %v455
        %469 = vmatpush.bf16.msra.mxu0 %v454
        %470 = vmatmul.bf16.gmra.mxu0 %v460
        %v471 = vpop.f32.mrf.mxu0
        %v472 = vadd.f32 0.0, %v471
        %v473 = vpop.f32.mrf.mxu0
        %v474 = vadd.f32 0.0, %v473
        %475 = vdwg.mxu0
        %v476 = vld [vmem:[#allocation7] sm:$0xf]
        %v477 = vld [vmem:[#allocation7 + $0x4] sm:$0xf]
        %v478 = vld [vmem:[#allocation7 + $0x8] sm:$0xf]
        %v479 = vld [vmem:[#allocation7 + $0xc] sm:$0xf]
        %v484 = vunpack.c.l.b16 %v476
        %v485 = vunpack.c.l.b16 %v477
        %v486 = vunpack.c.l.b16 %v478
        %v487 = vunpack.c.l.b16 %v479
        %v488 = vpack.c.b16 %v485, %v484
        %v489 = vpack.c.b16 %v487, %v486
        %492 = vmatpush.bf16.msra.mxu0 0
        %493 = vmatpush.bf16.msra.mxu0 0
        %494 = vmatpush.bf16.msra.mxu0 0
        %495 = vmatpush.bf16.msra.mxu0 0
        %496 = vmatpush.bf16.msra.mxu0 0
        %497 = vmatpush.bf16.msra.mxu0 0
        %498 = vmatpush.bf16.msra.mxu0 %v489
        %499 = vmatpush.bf16.msra.mxu0 %v488
        %500 = vmatmul.bf16.gmra.mxu0 %v460
        %v501 = vpop.f32.mrf.mxu0
        %v502 = vadd.f32 0.0, %v501
        %v503 = vpop.f32.mrf.mxu0
        %v504 = vadd.f32 0.0, %v503
        %505 = vdwg.mxu0
        %v506 = vld [vmem:[#allocation8] sm:$0xf]
        %v507 = vld [vmem:[#allocation8 + $0x4] sm:$0xf]
        %v508 = vld [vmem:[#allocation8 + $0x8] sm:$0xf]
        %v509 = vld [vmem:[#allocation8 + $0xc] sm:$0xf]
        %v514 = vunpack.c.l.b16 %v506
        %v515 = vunpack.c.l.b16 %v507
        %v516 = vunpack.c.l.b16 %v508
        %v517 = vunpack.c.l.b16 %v509
        %v518 = vpack.c.b16 %v515, %v514
        %v519 = vpack.c.b16 %v517, %v516
        %522 = vmatpush.bf16.msra.mxu0 0
        %523 = vmatpush.bf16.msra.mxu0 0
        %524 = vmatpush.bf16.msra.mxu0 0
        %525 = vmatpush.bf16.msra.mxu0 0
        %526 = vmatpush.bf16.msra.mxu0 0
        %527 = vmatpush.bf16.msra.mxu0 0
        %528 = vmatpush.bf16.msra.mxu0 %v519
        %529 = vmatpush.bf16.msra.mxu0 %v518
        %530 = vmatmul.bf16.gmra.mxu0 %v460
        %v531 = vpop.f32.mrf.mxu0
        %v532 = vadd.f32 0.0, %v531
        %v533 = vpop.f32.mrf.mxu0
        %v534 = vadd.f32 0.0, %v533
        %535 = vdwg.mxu0
        %v536 = vpack.c.bf16 %v472, %v472
        %v537 = vpack.c.bf16 %v474, %v474
        %v538 = vpack.c.bf16 %v502, %v502
        %v539 = vpack.c.bf16 %v504, %v504
        %v540 = vpack.c.bf16 %v532, %v532
        %v541 = vpack.c.bf16 %v534, %v534
        %v544 = vunpack.c.l.b16 %v536
        %v545 = vunpack.c.l.b16 %v537
        %v546 = vpack.c.b16 %v545, %v544
        %v549 = vunpack.c.l.b16 %v538
        %v550 = vunpack.c.l.b16 %v539
        %v551 = vpack.c.b16 %v550, %v549
        %v553 = vsel %vm458, %v546, 0
        %v556 = vsel %vm458, %v551, 0
        %558 = vmatpush.bf16.xpose.msra.mxu0 0
        %559 = vmatpush.bf16.xpose.msra.mxu0 0
        %560 = vmatpush.bf16.xpose.msra.mxu0 0
        %561 = vmatpush.bf16.xpose.msra.mxu0 0
        %562 = vmatpush.bf16.xpose.msra.mxu0 0
        %563 = vmatpush.bf16.xpose.msra.mxu0 0
        %564 = vmatpush.bf16.xpose.msra.mxu0 0
        %565 = vmatpush.bf16.xpose.msra.mxu0 %v556
        %566 = vmatmul.bf16.gmra.mxu0 %v553
        %v567 = vpop.f32.mrf.mxu0
        %v568 = vadd.f32 0.0, %v567
        %v569 = vpop.f32.mrf.mxu0
        %v570 = vadd.f32 0.0, %v569
        %571 = vdwg.mxu0
        %vm572 = vcmask 130048
        %v573 = vsel %vm572, %v568, -inf
        %574 = vmax.xlane.f32.xlu0 %v573
        %v575 = vpop.xlane.xlu0 %574
        %v576 = vsel %vm572, %v570, -inf
        %577 = vmax.xlane.f32.xlu0 %v576
        %v578 = vpop.xlane.xlu0 %577
        %v579 = vsub.f32 %v568, %v575
        %v580 = vsub.f32 %v570, %v578
        %v581 = vmul.f32 %v579, 1.442695
        %v582 = vpow.pop %v581
        %v583 = vmul.f32 %v580, 1.442695
        %v584 = vpow.pop %v583
        %v585 = vsel %vm572, %v582, 0.0
        %586 = vadd.xlane.f32.xlu0 %v585
        %v587 = vpop.xlane.xlu0 %586
        %v588 = vsel %vm572, %v584, 0.0
        %589 = vadd.xlane.f32.xlu0 %v588
        %v590 = vpop.xlane.xlu0 %589
        %v591 = vrcp.pop %v587
        %v592 = vrcp.pop %v590
        %v593 = vmul.f32 %v582, %v591
        %v594 = vmul.f32 %v584, %v592
        %v595 = vpack.c.bf16 %v593, %v593
        %v596 = vpack.c.bf16 %v594, %v594
        %v599 = vunpack.c.l.b16 %v595
        %v600 = vunpack.c.l.b16 %v596
        %v601 = vpack.c.b16 %v600, %v599
        %v604 = vunpack.c.l.b16 %v540
        %v605 = vunpack.c.l.b16 %v541
        %v606 = vpack.c.b16 %v605, %v604
        %v609 = vsel %vm572, %v601, 0
        %611 = vmatpush.bf16.msra.mxu0 0
        %612 = vmatpush.bf16.msra.mxu0 0
        %613 = vmatpush.bf16.msra.mxu0 0
        %614 = vmatpush.bf16.msra.mxu0 0
        %615 = vmatpush.bf16.msra.mxu0 0
        %616 = vmatpush.bf16.msra.mxu0 0
        %617 = vmatpush.bf16.msra.mxu0 0
        %618 = vmatpush.bf16.msra.mxu0 %v606
        %619 = vmatmul.bf16.gmra.mxu0 %v609
        %v620 = vpop.f32.mrf.mxu0
        %v621 = vadd.f32 0.0, %v620
        %v622 = vpop.f32.mrf.mxu0
        %v623 = vadd.f32 0.0, %v622
        %624 = vdwg.mxu0
        %v625 = vpack.c.bf16 %v621, %v621
        %v626 = vpack.c.bf16 %v623, %v623
        %v627 = vld [vmem:[%s5] sm:$0xf]
        %v628 = vld [vmem:[%s5 + $0x4] sm:$0xf]
        %v629 = vld [vmem:[%s5 + $0x8] sm:$0xf]
        %v630 = vld [vmem:[%s5 + $0xc] sm:$0xf]
        %v633 = vunpack.c.l.b16 %v625
        %v634 = vunpack.c.l.b16 %v626
        %v635 = vpack.c.b16 %v634, %v633
        %v640 = vunpack.c.l.b16 %v627
        %v641 = vunpack.c.l.b16 %v628
        %v642 = vunpack.c.l.b16 %v629
        %v643 = vunpack.c.l.b16 %v630
        %v644 = vpack.c.b16 %v641, %v640
        %v645 = vpack.c.b16 %v643, %v642
        %v649 = vsel %vm458, %v635, 0
        %651 = vmatpush.bf16.msra.mxu0 0
        %652 = vmatpush.bf16.msra.mxu0 0
        %653 = vmatpush.bf16.msra.mxu0 0
        %654 = vmatpush.bf16.msra.mxu0 0
        %655 = vmatpush.bf16.msra.mxu0 0
        %656 = vmatpush.bf16.msra.mxu0 0
        %657 = vmatpush.bf16.msra.mxu0 %v645
        %658 = vmatpush.bf16.msra.mxu0 %v644
        %659 = vmatmul.bf16.gmra.mxu0 %v649
        %v660 = vpop.f32.mrf.mxu0
        %v661 = vadd.f32 0.0, %v660
        %v662 = vpop.f32.mrf.mxu0
        %v663 = vadd.f32 0.0, %v662
        %664 = vdwg.mxu0
        %v665 = vpack.c.bf16 %v661, %v661
        %v666 = vpack.c.bf16 %v663, %v663
        %v667 = vld [vmem:[%s6] sm:$0x1]
        %v669 = vperm.slane %v667, 0
        %v673 = vunpack.c.l.b16 %v435
        %v674 = vunpack.c.l.b16 %v436
        %v675 = vpack.c.b16 %v674, %v673
        %v678 = vunpack.c.l.b16 %v665
        %v679 = vunpack.c.l.b16 %v666
        %v680 = vpack.c.b16 %v679, %v678
        %v683 = vsel %vm572, %v675, 0
        %685 = vmatpush.bf16.msra.mxu0 0
        %686 = vmatpush.bf16.msra.mxu0 0
        %687 = vmatpush.bf16.msra.mxu0 0
        %688 = vmatpush.bf16.msra.mxu0 0
        %689 = vmatpush.bf16.msra.mxu0 0
        %690 = vmatpush.bf16.msra.mxu0 0
        %691 = vmatpush.bf16.msra.mxu0 0
        %692 = vmatpush.bf16.msra.mxu0 %v680
        %693 = vmatmul.bf16.gmra.mxu0 %v683
        %v694 = vpop.f32.mrf.mxu0
        %v695 = vadd.f32 %v669, %v694
        %v696 = vpop.f32.mrf.mxu0
        %v697 = vadd.f32 %v669, %v696
        %698 = vdwg.mxu0
        %v699 = vmax.f32 %v695, 0.0
        %v700 = vmax.f32 %v697, 0.0
        %v701 = vpack.c.bf16 %v699, %v699
        %v702 = vpack.c.bf16 %v700, %v700
        %v703 = vld [vmem:[%s7] sm:$0xf]
        %v704 = vld [vmem:[%s7 + $0x4] sm:$0xf]
        %v707 = vunpack.c.l.b16 %v701
        %v708 = vunpack.c.l.b16 %v702
        %v709 = vpack.c.b16 %v708, %v707
        %v712 = vunpack.c.l.b16 %v703
        %v713 = vunpack.c.l.b16 %v704
        %v714 = vpack.c.b16 %v713, %v712
        %v717 = vsel %vm572, %v709, 0
        %719 = vmatpush.bf16.msra.mxu0 0
        %720 = vmatpush.bf16.msra.mxu0 0
        %721 = vmatpush.bf16.msra.mxu0 0
        %722 = vmatpush.bf16.msra.mxu0 0
        %723 = vmatpush.bf16.msra.mxu0 0
        %724 = vmatpush.bf16.msra.mxu0 0
        %725 = vmatpush.bf16.msra.mxu0 0
        %726 = vmatpush.bf16.msra.mxu0 %v714
        %727 = vmatmul.bf16.gmra.mxu0 %v717
        %v728 = vpop.f32.mrf.mxu0
        %v729 = vadd.f32 0.0, %v728
        %v730 = vpop.f32.mrf.mxu0
        %v731 = vadd.f32 0.0, %v730
        %732 = vdwg.mxu0
        %v733 = vpack.c.bf16 %v729, %v729
        %v734 = vpack.c.bf16 %v731, %v731
        %v735 = vld [vmem:[%s8] sm:$0x1]
        %v737 = vperm.slane %v735, 0
        %v741 = vunpack.c.l.b16 %v733
        %v742 = vunpack.c.l.b16 %v734
        %v743 = vpack.c.b16 %v742, %v741
        %745 = vmatpush.bf16.msra.mxu0 0
        %746 = vmatpush.bf16.msra.mxu0 0
        %747 = vmatpush.bf16.msra.mxu0 0
        %748 = vmatpush.bf16.msra.mxu0 0
        %749 = vmatpush.bf16.msra.mxu0 0
        %750 = vmatpush.bf16.msra.mxu0 0
        %751 = vmatpush.bf16.msra.mxu0 0
        %752 = vmatpush.bf16.msra.mxu0 %v743
        %753 = vmatmul.bf16.gmra.mxu0 %v683
        %v754 = vpop.f32.mrf.mxu0
        %v755 = vadd.f32 %v737, %v754
        %v756 = vpop.f32.mrf.mxu0
        %v757 = vadd.f32 %v737, %v756
        %758 = vdwg.mxu0
        %759 = vst.msk [vmem:[%s427] sm:$0xff] %vm458, %v755
        %760 = vst.msk [vmem:[%s427 + $0x8] sm:$0xff] %vm458, %v757
        %s761 = sand.u32 %s237, 1
        %s762 = scalar_lea.sflag [#allocation4], %s761
        %s763 = sand.u32 %s237, 1
        %s764 = smul.addr %s763, 16
        %s765 = scalar_lea.vmem [#allocation10], %s764
        // Predicated region
        $region73: #{tpu_custom_call.1} parent=55 // pred_check
          %p766 = pneg %p247
        $region74: #{tpu_custom_call.1} parent=55 // pred_check_branch
          %768 = sbr.rel (%p766) target = $region76
        $region75: #{tpu_custom_call.1} parent=55 // pred_region
          %770 = vsyncadd %s762, 0
          %s771 = smul.addr %s30, 2
          %s772 = smul.addr %s771, 8
          %s773 = scalar_lea.hbm %s9, %s772
          %s774 = sshll.u32 %s765, 4
          %s775 = int_to_ptr.vmem [resolvable:$true] %s774
          %s776 = sshll.u32 %s773, 4
          %s777 = int_to_ptr.hbm [resolvable:$true] %s776
          %782 = dma.vmem_to_hbm [thread:$0]  %s775, 256, %s777, %s762, 128, 128, 8
        $region76: #{tpu_custom_call.1} parent=55 // pred_fallthru
          _
      $region56: #{tpu_custom_call.1} parent=5 // pred_fallthru
        _
      %p783 = scmp.le.s32.totalorder 2, %s25
      // Predicated region
      $region77: #{tpu_custom_call.1} parent=5 // pred_check
        %p784 = pneg %p783
      $region78: #{tpu_custom_call.1} parent=5 // pred_check_branch
        %786 = sbr.rel (%p784) target = $region80
      $region79: #{tpu_custom_call.1} parent=5 // pred_region
        %s787 = ssub.s32 %s25, 2
        // Predicated region
        $region81: #{tpu_custom_call.1} parent=79 // pred_check
          %p788 = pneg %p253
        $region82: #{tpu_custom_call.1} parent=79 // pred_check_branch
          %790 = sbr.rel (%p788) target = $region84
        $region83: #{tpu_custom_call.1} parent=79 // pred_region
          %s791 = sand.u32 %s238, 1
          %s792 = scalar_lea.sflag [#allocation4], %s791
          %s793 = sand.u32 %s238, 1
          %s794 = smul.addr %s793, 16
          %s795 = scalar_lea.vmem [#allocation10], %s794
          %797 = dma.done %s792, 256
        $region84: #{tpu_custom_call.1} parent=79 // pred_fallthru
          _
      $region80: #{tpu_custom_call.1} parent=5 // pred_fallthru
        _
    $region6: #{tpu_custom_call.1} parent=1 // loop_footer
      %s29 = sadd.s32 1, %s25
    $region7: #{tpu_custom_call.1} parent=1 // loop_footer_branch
      %24 = sbr.rel target = $region3
    $region8: #{tpu_custom_call.1} parent=1 // loop_exit
      _
    %798 = vsyncpa [#allocation3], 1
    %s799 = scalar_lea.sflag [#allocation3], 1
    %800 = vsyncpa %s799, 1
    %801 = vsyncpa [#allocation6], 1
    %s802 = scalar_lea.sflag [#allocation6], 1
    %803 = vsyncpa %s802, 1
    %804 = vsyncpa [#allocation9], 1
    %805 = vsyncpa [#allocation4], 1
    %s806 = scalar_lea.sflag [#allocation4], 1
    %807 = vsyncpa %s806, 1

</llo_original>
